<compile_context>
chip_gen: v6e
topology: v6e:2x2x1
jax: 0.10.0
libtpu: 0.0.40
codegen_flags: <defaults>
</compile_context>

<pallas_src>
import functools

import jax
import jax.numpy as jnp
from jax import lax
from jax.experimental import pallas as pl
from jax.experimental.pallas import tpu as pltpu


# ---------------------------------------------------------------------------
# Kernel
# ---------------------------------------------------------------------------
def _attention_kernel(k_valid, q_ref, k_ref, v_ref, attn_ref, out_ref):
    # q_ref: (bn, tq, E); k_ref / v_ref: (bn, K_pad, E)
    q = q_ref[...]
    k = k_ref[...]
    v = v_ref[...]

    # energy[b, q, k] = sum_e q[b,q,e] * k[b,k,e]
    # Batched contraction over the last axis of both operands -> MXU consumes
    # k in its natural (K, E) layout (no transpose materialized).  Operands in
    # bf16, accumulation in f32.
    energy = jnp.einsum(
        'bqe,bke->bqk',
        q.astype(jnp.bfloat16), k.astype(jnp.bfloat16),
        preferred_element_type=jnp.float32)                      # (bn, tq, Kp)

    # Mask padded key columns (only present when K was padded to a lane-dense
    # multiple of 128 in the wrapper).
    k_pad = k_ref.shape[1]
    if k_valid != k_pad:
        col = lax.broadcasted_iota(jnp.int32, energy.shape, dimension=2)
        energy = jnp.where(col < k_valid, energy, jnp.float32(-1e30))

    # Numerically-stable softmax over the key axis, all in f32.  Exact divide:
    # the attention matrix is a returned output, so rows must sum to 1.
    m = jnp.max(energy, axis=-1, keepdims=True)
    p = jnp.exp(energy - m)
    denom = jnp.sum(p, axis=-1, keepdims=True)
    attn = p / denom                                             # (bn, tq, Kp)

    # output[b, q, e] = sum_k attn[b,q,k] * v[b,k,e]  -> MXU, bf16 operands.
    out = jnp.einsum(
        'bqk,bke->bqe',
        attn.astype(jnp.bfloat16), v.astype(jnp.bfloat16),
        preferred_element_type=jnp.float32)                      # (bn, tq, E)

    attn_ref[...] = attn.astype(attn_ref.dtype)
    out_ref[...] = out.astype(out_ref.dtype)


# ---------------------------------------------------------------------------
# Tile selection (generation-aware, honest VMEM accounting, grid guard)
# ---------------------------------------------------------------------------
def _vmem_config():
    """(vmem_limit_bytes, tile_budget_bytes, q_tile_cap) per TPU generation."""
    try:
        phys = pltpu.get_tpu_info().vmem_capacity_bytes
    except Exception:
        phys = 64 * 1024 * 1024          # conservative (v7x-sized) fallback
    if phys >= 96 * 1024 * 1024:         # v5e / v6e: 128 MiB physical VMEM
        return 64 * 1024 * 1024, 48 * 1024 * 1024, 512
    else:                                # v7x: 64 MiB physical VMEM
        return 32 * 1024 * 1024, 24 * 1024 * 1024, 256


def _q_tile_candidates(Q, cap):
    """Divisors of Q (descending, capped) keeping the sublane dim legal."""
    cap = min(Q, cap)
    cands = [d for d in range(cap, 0, -1)
             if Q % d == 0 and (d == Q or d % 8 == 0)]
    return cands if cands else [Q]


def _vmem_estimate(bn, tq, K, E, itemsize):
    """Bytes of VMEM for one grid step, including in-kernel temporaries."""
    q_blk = 2 * bn * tq * E * itemsize            # q block, double-buffered
    kv_blk = 2 * 2 * bn * K * E * itemsize        # keys+values, double-buffered
    attn_blk = 2 * bn * tq * K * 4                # attn output block
    out_blk = 2 * bn * tq * E * 4                 # out block
    # In-kernel temporaries: energy, p, attn (f32) + bf16 operand copies +
    # f32 out before the store.
    temps = (3 * bn * tq * K * 4
             + 2 * bn * tq * E * 4
             + 2 * bn * K * E * 2)
    return q_blk + kv_blk + attn_blk + out_blk + temps


def _choose_blocks(N, Q, K, E, itemsize, budget_bytes, q_cap):
    """Pick (block_n, block_q).

    Priority: (1) fit the VMEM budget, (2) avoid a degenerate grid (prefer
    >=4 total steps, then >=2) so pipelining and the v7x second TensorCore
    are usable, (3) maximize block_q (MXU M-dim / lane-dense store slab),
    (4) only then grow block_n (per-step overhead amortization).
    """
    q_cands = _q_tile_candidates(Q, q_cap)
    n_cands = [d for d in range(1, N + 1) if N % d == 0]

    best, best_key = None, None
    for tq in q_cands:
        for bn in n_cands:
            if _vmem_estimate(bn, tq, K, E, itemsize) > budget_bytes:
                continue
            steps = (N // bn) * (Q // tq)
            tier = 2 if steps >= 4 else (1 if steps >= 2 else 0)
            key = (tier, tq, bn)
            if best_key is None or key > best_key:
                best, best_key = (bn, tq), key
    if best is None:                     # nothing fits: smallest legal tile
        return 1, q_cands[-1]
    return best


# ---------------------------------------------------------------------------
# Wrapper
# ---------------------------------------------------------------------------
def attention(query, keys, values, *, block_n=None, block_q=None):
    """Pallas implementation of Attention.forward.

    query:  (N, Q, E);  keys/values: (N, K, E)
    returns (attention (N, Q, K) f32, output (N, Q, E) f32)
    """
    N, Q, E = query.shape
    _, K, _ = keys.shape
    itemsize = jnp.dtype(query.dtype).itemsize

    vmem_limit, budget, q_cap = _vmem_config()

    # Lane-dense attention store: pad K up to a multiple of 128 when K is
    # ragged and large enough that the padding overhead is modest (<2x).
    # Padded logits are masked to -inf in the kernel; the output is sliced.
    K_pad = K
    if K % 128 != 0 and K >= 128:
        K_pad = ((K + 127) // 128) * 128
        pad = K_pad - K
        keys = jnp.pad(keys, ((0, 0), (0, pad), (0, 0)))
        values = jnp.pad(values, ((0, 0), (0, pad), (0, 0)))

    if block_n is None or block_q is None:
        bn, tq = _choose_blocks(N, Q, K_pad, E, itemsize, budget, q_cap)
        block_n = block_n if block_n is not None else bn
        block_q = block_q if block_q is not None else tq
    assert N % block_n == 0, f"block_n={block_n} must divide N={N}"
    assert Q % block_q == 0, f"block_q={block_q} must divide Q={Q}"

    grid = (N // block_n, Q // block_q)

    grid_spec = pltpu.PrefetchScalarGridSpec(
        num_scalar_prefetch=0,
        grid=grid,
        in_specs=[
            pl.BlockSpec((block_n, block_q, E), lambda n, qi: (n, qi, 0)),
            pl.BlockSpec((block_n, K_pad, E), lambda n, qi: (n, 0, 0)),
            pl.BlockSpec((block_n, K_pad, E), lambda n, qi: (n, 0, 0)),
        ],
        out_specs=[
            pl.BlockSpec((block_n, block_q, K_pad), lambda n, qi: (n, qi, 0)),
            pl.BlockSpec((block_n, block_q, E), lambda n, qi: (n, qi, 0)),
        ],
    )

    # Advisory cost estimate so XLA schedules surrounding ops sensibly.
    flops = 4 * N * Q * K_pad * E                       # two contractions
    bytes_accessed = ((N * Q * E + 2 * N * K_pad * E) * itemsize
                      + N * Q * K_pad * 4 + N * Q * E * 4)
    cost = pl.CostEstimate(flops=flops, transcendentals=N * Q * K_pad,
                           bytes_accessed=bytes_accessed)

    attn, out = pl.pallas_call(
        functools.partial(_attention_kernel, K),
        out_shape=(
            jax.ShapeDtypeStruct((N, Q, K_pad), jnp.float32),
            jax.ShapeDtypeStruct((N, Q, E), jnp.float32),
        ),
        grid_spec=grid_spec,
        compiler_params=pltpu.CompilerParams(
            dimension_semantics=("parallel", "parallel"),
            vmem_limit_bytes=vmem_limit,
        ),
        cost_estimate=cost,
    )(query, keys, values)

    if K_pad != K:
        attn = attn[:, :, :K]
    return attn, out


# ---------------------------------------------------------------------------
# References
# ---------------------------------------------------------------------------
def attention_ref(query, keys, values, mxu_dtype=None):
    """Pure-JAX reference.  If mxu_dtype is given, matmul operands are cast to
    that dtype (mirrors the kernel's bf16 MXU operands, f32 accumulation)."""
    if mxu_dtype is not None:
        qm, km = query.astype(mxu_dtype), keys.astype(mxu_dtype)
    else:
        qm, km = query, keys
    energy = jnp.einsum('nqe,nke->nqk', qm, km,
                        preferred_element_type=jnp.float32)
    attn = jax.nn.softmax(energy, axis=-1)
    if mxu_dtype is not None:
        am, vm = attn.astype(mxu_dtype), values.astype(mxu_dtype)
    else:
        am, vm = attn, values
    out = jnp.einsum('nqk,nke->nqe', am, vm,
                     preferred_element_type=jnp.float32)
    return attn, out


if __name__ == "__main__":
    key = jax.random.PRNGKey(0)
    k1, k2, k3 = jax.random.split(key, 3)

    # batch, query_len, key_len (num_reviews), embed_dim
    N, Q, K, E = 2, 8, 8, 32
    query = jax.random.normal(k1, (N, Q, E), dtype=jnp.float32)
    keys = jax.random.normal(k2, (N, K, E), dtype=jnp.float32)
    values = jax.random.normal(k3, (N, K, E), dtype=jnp.float32)

    attn, out = attention(query, keys, values)
    jax.block_until_ready((attn, out))

    # Tight check against a reference that uses the same bf16 MXU-operand
    # semantics as the kernel (f32 softmax, f32 accumulation).
    attn_b, out_b = attention_ref(query, keys, values, mxu_dtype=jnp.bfloat16)
    assert jnp.allclose(attn, attn_b, atol=2e-3, rtol=2e-3), \
        float(jnp.max(jnp.abs(attn - attn_b)))
    assert jnp.allclose(out, out_b, atol=1e-2, rtol=1e-2), \
        float(jnp.max(jnp.abs(out - out_b)))

    # Looser sanity check against the exact f32 reference (the gap is the
    # expected bf16 rounding of the MXU operands).
    attn_r, out_r = attention_ref(query, keys, values)
    assert jnp.allclose(attn, attn_r, atol=5e-2, rtol=5e-2), \
        float(jnp.max(jnp.abs(attn - attn_r)))
    assert jnp.allclose(out, out_r, atol=1e-1, rtol=1e-1), \
        float(jnp.max(jnp.abs(out - out_r)))

    # Exact softmax divide in the kernel -> rows of attention sum to 1.
    assert jnp.allclose(jnp.sum(attn, axis=-1), 1.0, atol=1e-4)

    print("KERNEL_OK")
</pallas_src>

<mosaic_0001>
module attributes {stable_mosaic.version = 11 : i64} {
  func.func @_attention_kernel(%arg0: i32, %arg1: i32, %arg2: memref<1x8x32xf32, #tpu.memory_space<vmem>>, %arg3: memref<1x8x32xf32, #tpu.memory_space<vmem>>, %arg4: memref<1x8x32xf32, #tpu.memory_space<vmem>>, %arg5: memref<1x8x8xf32, #tpu.memory_space<vmem>>, %arg6: memref<1x8x32xf32, #tpu.memory_space<vmem>>) attributes {dimension_semantics = [#tpu.dimension_semantics<parallel>, #tpu.dimension_semantics<parallel>], iteration_bounds = array<i64: 2, 1>, scalar_prefetch = 0 : i64, scratch_operands = 0 : i64, tpu.core_type = #tpu.core_type<tc>, window_params = [{transform_indices = @transform_0, window_bounds = array<i64: 1, 8, 32>}, {transform_indices = @transform_1, window_bounds = array<i64: 1, 8, 32>}, {transform_indices = @transform_2, window_bounds = array<i64: 1, 8, 32>}, {transform_indices = @transform_3, window_bounds = array<i64: 1, 8, 8>}, {transform_indices = @transform_4, window_bounds = array<i64: 1, 8, 32>}]} {
    %c0 = arith.constant 0 : index
    %c0_0 = arith.constant 0 : index
    %c0_1 = arith.constant 0 : index
    %0 = vector.load %arg2[%c0, %c0_0, %c0_1] : memref<1x8x32xf32, #tpu.memory_space<vmem>>, vector<1x8x32xf32>
    %c0_2 = arith.constant 0 : index
    %c0_3 = arith.constant 0 : index
    %c0_4 = arith.constant 0 : index
    %1 = vector.load %arg3[%c0_2, %c0_3, %c0_4] : memref<1x8x32xf32, #tpu.memory_space<vmem>>, vector<1x8x32xf32>
    %c0_5 = arith.constant 0 : index
    %c0_6 = arith.constant 0 : index
    %c0_7 = arith.constant 0 : index
    %2 = vector.load %arg4[%c0_5, %c0_6, %c0_7] : memref<1x8x32xf32, #tpu.memory_space<vmem>>, vector<1x8x32xf32>
    %3 = arith.truncf %0 : vector<1x8x32xf32> to vector<1x8x32xbf16>
    %4 = arith.truncf %1 : vector<1x8x32xf32> to vector<1x8x32xbf16>
    "tpu.trace_start"() <{level = 10 : i32, message = "bqe,bke->bqk"}> : () -> ()
    %cst = arith.constant dense<0.000000e+00> : vector<1x8x8xf32>
    %5 = tpu.matmul %3, %4, %cst {dimension_numbers = #tpu.dot_dimension_numbers<[2], [2], [1], [1], [0, 0, 0, 1, 1, 1], [0], [0]>} : vector<1x8x32xbf16>, vector<1x8x32xbf16>, vector<1x8x8xf32> -> vector<1x8x8xf32>
    "tpu.trace_stop"() : () -> ()
    %cst_8 = arith.constant dense<0xFF800000> : vector<1x8xf32>
    %6 = vector.multi_reduction <maximumf>, %5, %cst_8 [2] : vector<1x8x8xf32> to vector<1x8xf32>
    %7 = vector.shape_cast %6 : vector<1x8xf32> to vector<1x8x1xf32>
    %8 = vector.broadcast %7 : vector<1x8x1xf32> to vector<1x8x8xf32>
    %9 = arith.subf %5, %8 : vector<1x8x8xf32>
    %10 = math.exp %9 : vector<1x8x8xf32>
    %cst_9 = arith.constant dense<0.000000e+00> : vector<1x8xf32>
    %11 = vector.multi_reduction <add>, %10, %cst_9 [2] : vector<1x8x8xf32> to vector<1x8xf32>
    %12 = vector.shape_cast %11 : vector<1x8xf32> to vector<1x8x1xf32>
    %13 = vector.broadcast %12 : vector<1x8x1xf32> to vector<1x8x8xf32>
    %14 = arith.divf %10, %13 : vector<1x8x8xf32>
    %15 = arith.truncf %14 : vector<1x8x8xf32> to vector<1x8x8xbf16>
    %16 = arith.truncf %2 : vector<1x8x32xf32> to vector<1x8x32xbf16>
    "tpu.trace_start"() <{level = 10 : i32, message = "bqk,bke->bqe"}> : () -> ()
    %cst_10 = arith.constant dense<0.000000e+00> : vector<1x8x32xf32>
    %17 = tpu.matmul %15, %16, %cst_10 {dimension_numbers = #tpu.dot_dimension_numbers<[2], [1], [1], [2], [0, 0, 0, 1, 1, 2], [0], [0]>} : vector<1x8x8xbf16>, vector<1x8x32xbf16>, vector<1x8x32xf32> -> vector<1x8x32xf32>
    "tpu.trace_stop"() : () -> ()
    %c0_11 = arith.constant 0 : index
    %c0_12 = arith.constant 0 : index
    %c0_13 = arith.constant 0 : index
    %18 = vector.load %arg5[%c0_11, %c0_12, %c0_13] : memref<1x8x8xf32, #tpu.memory_space<vmem>>, vector<1x8x8xf32>
    tpu.vector_store %arg5[%c0_11, %c0_12, %c0_13], %14 {strides = array<i32>} : memref<1x8x8xf32, #tpu.memory_space<vmem>>, vector<1x8x8xf32>,
    %c0_14 = arith.constant 0 : index
    %c0_15 = arith.constant 0 : index
    %c0_16 = arith.constant 0 : index
    %19 = vector.load %arg6[%c0_14, %c0_15, %c0_16] : memref<1x8x32xf32, #tpu.memory_space<vmem>>, vector<1x8x32xf32>
    tpu.vector_store %arg6[%c0_14, %c0_15, %c0_16], %17 {strides = array<i32>} : memref<1x8x32xf32, #tpu.memory_space<vmem>>, vector<1x8x32xf32>,
    return
  }
  func.func @transform_0(%arg0: i32, %arg1: i32) -> (i32, i32, i32) {
    %c0_i32 = arith.constant 0 : i32
    %c0_i32_0 = arith.constant 0 : i32
    return %arg0, %arg1, %c0_i32 : i32, i32, i32
  }
  func.func @transform_1(%arg0: i32, %arg1: i32) -> (i32, i32, i32) {
    %c0_i32 = arith.constant 0 : i32
    %c0_i32_0 = arith.constant 0 : i32
    %c0_i32_1 = arith.constant 0 : i32
    return %arg0, %c0_i32, %c0_i32_0 : i32, i32, i32
  }
  func.func @transform_2(%arg0: i32, %arg1: i32) -> (i32, i32, i32) {
    %c0_i32 = arith.constant 0 : i32
    %c0_i32_0 = arith.constant 0 : i32
    %c0_i32_1 = arith.constant 0 : i32
    return %arg0, %c0_i32, %c0_i32_0 : i32, i32, i32
  }
  func.func @transform_3(%arg0: i32, %arg1: i32) -> (i32, i32, i32) {
    %c0_i32 = arith.constant 0 : i32
    %c0_i32_0 = arith.constant 0 : i32
    return %arg0, %arg1, %c0_i32 : i32, i32, i32
  }
  func.func @transform_4(%arg0: i32, %arg1: i32) -> (i32, i32, i32) {
    %c0_i32 = arith.constant 0 : i32
    %c0_i32_0 = arith.constant 0 : i32
    return %arg0, %arg1, %c0_i32 : i32, i32, i32
  }
}

</mosaic_0001>

<llo_original>
// kernel: tpu_custom_call.1
$region0: #{tpu_custom_call.1}
  #allocation0 [shape = 'u32[]', space=smem, size = 0x4, offset = 0x4, fixed_abs, tag = 'smem constant byte address 0x4 - core index']
  #allocation1 [shape = 'u32[144,128]{1,0:T(1,128)}', space=vmem, size = 0x12000, scoped, tag = 'internal scratch']
  %s0 = inlined_call_operand.hbm [shape: f32[2,8,32], index: 0, kind: input, shape index: {}]
  %s1 = inlined_call_operand.hbm [shape: f32[2,8,32], index: 1, kind: input, shape index: {}]
  %s2 = inlined_call_operand.hbm [shape: f32[2,8,32], index: 2, kind: input, shape index: {}]
  %s3 = inlined_call_operand.hbm [shape: f32[2,8,8], index: 3, kind: output, shape index: {0}]
  %s4 = inlined_call_operand.hbm [shape: f32[2,8,32], index: 4, kind: output, shape index: {1}]
  %5 = xla_tuple %s3, %s4
  %s6 = sld [smem:[#allocation0]]
  $region65: #{tpu_custom_call.1} parent=0
    _
  %s8 = ssub.s32 1, %s6
  %s9 = scalar_select 0, %s8, %s6
  $region1: #{tpu_custom_call.1} parent=0
    #allocation2 [shape = 'u8[8192]{0}', space=vmem, size = 0x2000, scoped, tag = 'input window, operand 0']
    #allocation3 [shape = 's32[2]{0}', space=sflag, size = 0x8, scoped, tag = 'scoped memory for tpu_custom_call.1']
    #allocation4 [shape = 's32[2]{0}', space=sflag, size = 0x8, scoped, tag = 'scoped memory for tpu_custom_call.1']
    #allocation5 [shape = 'u8[8192]{0}', space=vmem, size = 0x2000, scoped, tag = 'input window, operand 1']
    #allocation6 [shape = 's32[2]{0}', space=sflag, size = 0x8, scoped, tag = 'scoped memory for tpu_custom_call.1']
    #allocation7 [shape = 'u8[8192]{0}', space=vmem, size = 0x2000, scoped, tag = 'input window, operand 2']
    #allocation8 [shape = 'u8[8192]{0}', space=vmem, size = 0x2000, scoped, tag = 'output window, operand 0']
    #allocation9 [shape = 'u8[8192]{0}', space=vmem, size = 0x2000, scoped, tag = 'output window, operand 1']
    #allocation10 [shape = 's32[2]{0}', space=sflag, size = 0x8, scoped, tag = 'scoped memory for tpu_custom_call.1']
    %10 = vsyncpa [#allocation3], 0
    %s11 = scalar_lea.sflag [#allocation3], 1
    %12 = vsyncpa %s11, 0
    %13 = vsyncpa [#allocation6], 0
    %s14 = scalar_lea.sflag [#allocation6], 1
    %15 = vsyncpa %s14, 0
    %16 = vsyncpa [#allocation4], 0
    %s17 = scalar_lea.sflag [#allocation4], 1
    %18 = vsyncpa %s17, 0
    %19 = vsyncpa [#allocation10], 0
    %s20 = scalar_lea.sflag [#allocation10], 1
    %21 = vsyncpa %s20, 0
    loop: start=0, step=1, limit=4
    $region2: #{tpu_custom_call.1} parent=1 // loop_pre_header
      _
    $region3: #{tpu_custom_call.1} parent=1 // loop_header
      %s23 = sphi 0, %s27
      %p24 = scmp.ge.s32.totalorder %s23, 4
      %s30 = sphi 0, %s42
      %s31 = sphi 0, %s38
      %s32 = sphi 0, %s30
      %s33 = sphi 0, %s31
      %s34 = sphi 0, %s32
      %s35 = sphi 0, %s33
      %s47 = sphi 0, %s49
      %s50 = sphi 0, %s47
      %s51 = sphi 0, %s50
      %s67 = sphi 0, %s51
      %s73 = sphi 0, %s75
      %s76 = sphi 0, %s73
      %s77 = sphi 0, %s76
      %s93 = sphi 0, %s77
      %s99 = sphi 0, %s101
      %s102 = sphi 0, %s99
      %s103 = sphi 0, %s102
      %s119 = sphi 0, %s103
      %s127 = sphi 0, %s129
      %s130 = sphi 0, %s127
      %s131 = sphi 0, %s130
      %s147 = sphi 0, %s131
      %s155 = sphi 0, %s157
      %s158 = sphi 0, %s155
      %s159 = sphi 0, %s158
      %s175 = sphi 0, %s159
    $region4: #{tpu_custom_call.1} parent=1 // loop_header_branch
      %26 = sbr.rel (%p24) target = $region8
    $region5: #{tpu_custom_call.1} parent=1 // loop_body
      %s28 = ssub.s32 %s23, 1
      %s29 = ssub.s32 %s23, 2
      %s36 = sadd.s32 1, %s31
      %p37 = scmp.ge.s32.totalorder %s36, 1
      %s38 = scalar_select %p37, 0, %s36
      %s39 = sadd.s32 1, %s30
      %s40 = scalar_select %p37, %s39, %s30
      %p41 = scmp.ge.s32.totalorder %s40, 2
      %s42 = scalar_select %p41, 0, %s40
      %s43 = ssub.s32 %s30, %s42
      %s44 = ssub.s32 %s31, %s38
      %s45 = sor.u32 %s43, %s44
      %p46 = scmp.eq.s32.totalorder %s45, 0
      %s48 = sadd.s32 %s47, 1
      %s49 = scalar_select %p46, %s47, %s48
      %p52 = pneg %p46
      %p53 = scmp.eq.s32.totalorder %s23, 1
      %p54 = por %p52, %p53
      %p55 = scmp.ne.s32.totalorder %s47, %s50
      %p56 = scmp.eq.s32.totalorder %s23, 0
      %p57 = por %p55, %p56
      %p58 = scmp.ne.s32.totalorder %s47, %s50
      %p59 = scmp.eq.s32.totalorder %s28, 1
      %p60 = por %p58, %p59
      %p61 = scmp.ne.s32.totalorder %s50, %s51
      %p62 = scmp.eq.s32.totalorder %s28, 0
      %p63 = por %p61, %p62
      %p64 = scmp.ne.s32.totalorder %s50, %s51
      %p65 = scmp.eq.s32.totalorder %s29, 1
      %p66 = por %p64, %p65
      %p68 = scmp.ne.s32.totalorder %s51, %s67
      %p69 = scmp.eq.s32.totalorder %s29, 0
      %p70 = por %p68, %p69
      %s71 = ssub.s32 %s30, %s42
      %p72 = scmp.eq.s32.totalorder %s71, 0
      %s74 = sadd.s32 %s73, 1
      %s75 = scalar_select %p72, %s73, %s74
      %p78 = pneg %p72
      %p79 = scmp.eq.s32.totalorder %s23, 1
      %p80 = por %p78, %p79
      %p81 = scmp.ne.s32.totalorder %s73, %s76
      %p82 = scmp.eq.s32.totalorder %s23, 0
      %p83 = por %p81, %p82
      %p84 = scmp.ne.s32.totalorder %s73, %s76
      %p85 = scmp.eq.s32.totalorder %s28, 1
      %p86 = por %p84, %p85
      %p87 = scmp.ne.s32.totalorder %s76, %s77
      %p88 = scmp.eq.s32.totalorder %s28, 0
      %p89 = por %p87, %p88
      %p90 = scmp.ne.s32.totalorder %s76, %s77
      %p91 = scmp.eq.s32.totalorder %s29, 1
      %p92 = por %p90, %p91
      %p94 = scmp.ne.s32.totalorder %s77, %s93
      %p95 = scmp.eq.s32.totalorder %s29, 0
      %p96 = por %p94, %p95
      %s97 = ssub.s32 %s30, %s42
      %p98 = scmp.eq.s32.totalorder %s97, 0
      %s100 = sadd.s32 %s99, 1
      %s101 = scalar_select %p98, %s99, %s100
      %p104 = pneg %p98
      %p105 = scmp.eq.s32.totalorder %s23, 1
      %p106 = por %p104, %p105
      %p107 = scmp.ne.s32.totalorder %s99, %s102
      %p108 = scmp.eq.s32.totalorder %s23, 0
      %p109 = por %p107, %p108
      %p110 = scmp.ne.s32.totalorder %s99, %s102
      %p111 = scmp.eq.s32.totalorder %s28, 1
      %p112 = por %p110, %p111
      %p113 = scmp.ne.s32.totalorder %s102, %s103
      %p114 = scmp.eq.s32.totalorder %s28, 0
      %p115 = por %p113, %p114
      %p116 = scmp.ne.s32.totalorder %s102, %s103
      %p117 = scmp.eq.s32.totalorder %s29, 1
      %p118 = por %p116, %p117
      %p120 = scmp.ne.s32.totalorder %s103, %s119
      %p121 = scmp.eq.s32.totalorder %s29, 0
      %p122 = por %p120, %p121
      %s123 = ssub.s32 %s30, %s42
      %s124 = ssub.s32 %s31, %s38
      %s125 = sor.u32 %s123, %s124
      %p126 = scmp.eq.s32.totalorder %s125, 0
      %s128 = sadd.s32 %s127, 1
      %s129 = scalar_select %p126, %s127, %s128
      %p132 = pneg %p126
      %p133 = scmp.eq.s32.totalorder %s23, 1
      %p134 = por %p132, %p133
      %p135 = scmp.ne.s32.totalorder %s127, %s130
      %p136 = scmp.eq.s32.totalorder %s23, 0
      %p137 = por %p135, %p136
      %p138 = scmp.ne.s32.totalorder %s127, %s130
      %p139 = scmp.eq.s32.totalorder %s28, 1
      %p140 = por %p138, %p139
      %p141 = scmp.ne.s32.totalorder %s130, %s131
      %p142 = scmp.eq.s32.totalorder %s28, 0
      %p143 = por %p141, %p142
      %p144 = scmp.ne.s32.totalorder %s130, %s131
      %p145 = scmp.eq.s32.totalorder %s29, 1
      %p146 = por %p144, %p145
      %p148 = scmp.ne.s32.totalorder %s131, %s147
      %p149 = scmp.eq.s32.totalorder %s29, 0
      %p150 = por %p148, %p149
      %s151 = ssub.s32 %s30, %s42
      %s152 = ssub.s32 %s31, %s38
      %s153 = sor.u32 %s151, %s152
      %p154 = scmp.eq.s32.totalorder %s153, 0
      %s156 = sadd.s32 %s155, 1
      %s157 = scalar_select %p154, %s155, %s156
      %p160 = pneg %p154
      %p161 = scmp.eq.s32.totalorder %s23, 1
      %p162 = por %p160, %p161
      %p163 = scmp.ne.s32.totalorder %s155, %s158
      %p164 = scmp.eq.s32.totalorder %s23, 0
      %p165 = por %p163, %p164
      %p166 = scmp.ne.s32.totalorder %s155, %s158
      %p167 = scmp.eq.s32.totalorder %s28, 1
      %p168 = por %p166, %p167
      %p169 = scmp.ne.s32.totalorder %s158, %s159
      %p170 = scmp.eq.s32.totalorder %s28, 0
      %p171 = por %p169, %p170
      %p172 = scmp.ne.s32.totalorder %s158, %s159
      %p173 = scmp.eq.s32.totalorder %s29, 1
      %p174 = por %p172, %p173
      %p176 = scmp.ne.s32.totalorder %s159, %s175
      %p177 = scmp.eq.s32.totalorder %s29, 0
      %p178 = por %p176, %p177
      %p179 = scmp.le.s32.totalorder 1, %s23
      %p180 = scmp.lt.s32.totalorder %s23, 3
      %p181 = pnand %p179, %p180
      %p182 = pneg %p181
      // Predicated region
      $region9: #{tpu_custom_call.1} parent=5 // pred_check
        _
      $region10: #{tpu_custom_call.1} parent=5 // pred_check_branch
        %184 = sbr.rel (%p181) target = $region12
      $region11: #{tpu_custom_call.1} parent=5 // pred_region
        %s185 = ssub.s32 %s23, 1
      $region12: #{tpu_custom_call.1} parent=5 // pred_fallthru
        _
      %p186 = scmp.lt.s32.totalorder %s23, 2
      // Predicated region
      $region13: #{tpu_custom_call.1} parent=5 // pred_check
        %p187 = pneg %p186
      $region14: #{tpu_custom_call.1} parent=5 // pred_check_branch
        %189 = sbr.rel (%p187) target = $region16
      $region15: #{tpu_custom_call.1} parent=5 // pred_region
        // Predicated region
        $region17: #{tpu_custom_call.1} parent=15 // pred_check
          %p190 = pneg %p57
        $region18: #{tpu_custom_call.1} parent=15 // pred_check_branch
          %192 = sbr.rel (%p190) target = $region20
        $region19: #{tpu_custom_call.1} parent=15 // pred_region
          %s193 = sand.u32 %s47, 1
          %s194 = scalar_lea.sflag [#allocation3], %s193
          %s195 = sand.u32 %s47, 1
          %s196 = smul.addr %s195, 8
          %s197 = scalar_lea.vmem [#allocation2], %s196
          %s199 = ssub.s32 128, 128
          %200 = vsyncadd %s194, %s199
          %s201 = sadd.s32 %s31, %s30
          %s202 = smul.addr %s201, 128
          %s203 = scalar_lea.hbm %s0, %s202
          %s205 = sshll.u32 %s197, 4
          %s206 = int_to_ptr.vmem [resolvable:$true] %s205
          %208 = dma.hbm_to_vmem [thread:$0]  %s203, 128, %s206, %s194
        $region20: #{tpu_custom_call.1} parent=15 // pred_fallthru
          _
        // Predicated region
        $region21: #{tpu_custom_call.1} parent=15 // pred_check
          %p209 = pneg %p83
        $region22: #{tpu_custom_call.1} parent=15 // pred_check_branch
          %211 = sbr.rel (%p209) target = $region24
        $region23: #{tpu_custom_call.1} parent=15 // pred_region
          %s212 = sand.u32 %s23, 1
          %s213 = scalar_lea.sflag [#allocation6], %s212
          %s214 = sand.u32 %s73, 1
          %s215 = smul.addr %s214, 8
          %s216 = scalar_lea.vmem [#allocation5], %s215
          %s218 = ssub.s32 128, 128
          %219 = vsyncadd %s213, %s218
          %s220 = smul.addr %s30, 128
          %s221 = scalar_lea.hbm %s1, %s220
          %s223 = sshll.u32 %s216, 4
          %s224 = int_to_ptr.vmem [resolvable:$true] %s223
          %226 = dma.hbm_to_vmem [thread:$0]  %s221, 128, %s224, %s213
        $region24: #{tpu_custom_call.1} parent=15 // pred_fallthru
          _
        // Predicated region
        $region25: #{tpu_custom_call.1} parent=15 // pred_check
          %p227 = pneg %p109
        $region26: #{tpu_custom_call.1} parent=15 // pred_check_branch
          %229 = sbr.rel (%p227) target = $region28
        $region27: #{tpu_custom_call.1} parent=15 // pred_region
          %s230 = sand.u32 %s23, 1
          %s231 = scalar_lea.sflag [#allocation6], %s230
          %s232 = sand.u32 %s99, 1
          %s233 = smul.addr %s232, 8
          %s234 = scalar_lea.vmem [#allocation7], %s233
          %s236 = ssub.s32 128, 128
          %237 = vsyncadd %s231, %s236
          %s238 = smul.addr %s30, 128
          %s239 = scalar_lea.hbm %s2, %s238
          %s241 = sshll.u32 %s234, 4
          %s242 = int_to_ptr.vmem [resolvable:$true] %s241
          %244 = dma.hbm_to_vmem [thread:$0]  %s239, 128, %s242, %s231
        $region28: #{tpu_custom_call.1} parent=15 // pred_fallthru
          _
      $region16: #{tpu_custom_call.1} parent=5 // pred_fallthru
        _
      %p245 = scmp.le.s32.totalorder 1, %s23
      %p246 = scmp.lt.s32.totalorder %s23, 3
      %p247 = pnand %p245, %p246
      %p248 = pneg %p247
      // Predicated region
      $region29: #{tpu_custom_call.1} parent=5 // pred_check
        _
      $region30: #{tpu_custom_call.1} parent=5 // pred_check_branch
        %250 = sbr.rel (%p247) target = $region32
      $region31: #{tpu_custom_call.1} parent=5 // pred_region
        %s251 = ssub.s32 %s23, 1
        %s252 = sand.u32 %s50, 1
        %s253 = scalar_lea.sflag [#allocation3], %s252
        %s254 = sand.u32 %s50, 1
        %s255 = smul.addr %s254, 8
        %s256 = scalar_lea.vmem [#allocation2], %s255
        // Predicated region
        $region33: #{tpu_custom_call.1} parent=31 // pred_check
          %p257 = pneg %p63
        $region34: #{tpu_custom_call.1} parent=31 // pred_check_branch
          %259 = sbr.rel (%p257) target = $region36
        $region35: #{tpu_custom_call.1} parent=31 // pred_region
          %260 = dma.done %s253, 128
        $region36: #{tpu_custom_call.1} parent=31 // pred_fallthru
          _
        %s261 = sand.u32 %s28, 1
        %s262 = scalar_lea.sflag [#allocation6], %s261
        %s263 = sand.u32 %s76, 1
        %s264 = smul.addr %s263, 8
        %s265 = scalar_lea.vmem [#allocation5], %s264
        // Predicated region
        $region37: #{tpu_custom_call.1} parent=31 // pred_check
          %p266 = pneg %p89
        $region38: #{tpu_custom_call.1} parent=31 // pred_check_branch
          %268 = sbr.rel (%p266) target = $region40
        $region39: #{tpu_custom_call.1} parent=31 // pred_region
          %269 = dma.done %s262, 128
        $region40: #{tpu_custom_call.1} parent=31 // pred_fallthru
          _
        %s270 = sand.u32 %s28, 1
        %s271 = scalar_lea.sflag [#allocation6], %s270
        %s272 = sand.u32 %s102, 1
        %s273 = smul.addr %s272, 8
        %s274 = scalar_lea.vmem [#allocation7], %s273
        // Predicated region
        $region41: #{tpu_custom_call.1} parent=31 // pred_check
          %p275 = pneg %p115
        $region42: #{tpu_custom_call.1} parent=31 // pred_check_branch
          %277 = sbr.rel (%p275) target = $region44
        $region43: #{tpu_custom_call.1} parent=31 // pred_region
          %278 = dma.done %s271, 128
        $region44: #{tpu_custom_call.1} parent=31 // pred_fallthru
          _
        %s279 = sand.u32 %s50, 1
        %s280 = scalar_lea.sflag [#allocation3], %s279
        %s281 = sand.u32 %s50, 1
        %s282 = smul.addr %s281, 8
        %s283 = scalar_lea.vmem [#allocation2], %s282
        %p284 = pneg %p63
        %p285 = pneg %p60
        %s286 = sand.u32 %s28, 1
        %s287 = scalar_lea.sflag [#allocation6], %s286
        %s288 = sand.u32 %s76, 1
        %s289 = smul.addr %s288, 8
        %s290 = scalar_lea.vmem [#allocation5], %s289
        %p291 = pneg %p89
        %p292 = pneg %p86
        %s293 = sand.u32 %s28, 1
        %s294 = scalar_lea.sflag [#allocation6], %s293
        %s295 = sand.u32 %s102, 1
        %s296 = smul.addr %s295, 8
        %s297 = scalar_lea.vmem [#allocation7], %s296
        %p298 = pneg %p115
        %p299 = pneg %p112
        %p300 = pneg %p143
        %p301 = pneg %p140
        %s302 = sand.u32 %s130, 1
        %s303 = scalar_lea.sflag [#allocation4], %s302
        %s304 = sand.u32 %s130, 1
        %s305 = smul.addr %s304, 8
        %s306 = scalar_lea.vmem [#allocation8], %s305
        %p307 = pneg %p171
        %p308 = pneg %p168
        %s309 = sand.u32 %s158, 1
        %s310 = scalar_lea.sflag [#allocation10], %s309
        %s311 = sand.u32 %s158, 1
        %s312 = smul.addr %s311, 8
        %s313 = scalar_lea.vmem [#allocation9], %s312
        %v315 = vld [vmem:[%s256] sm:$0xff]
        %v316 = vld [vmem:[%s265] sm:$0xff]
        %v317 = vld [vmem:[%s274] sm:$0xff]
        %v318 = vpack.c.bf16 %v315, %v315
        %v319 = vpack.c.bf16 %v316, %v316
        %vm320 = vcmask 261120
        %v322 = vsel %vm320, %v318, 0
        %v325 = vsel %vm320, %v319, 0
        %327 = vmatprep.subr.bf16.mxu0 0
        %328 = vmatpush1.bf16.xpose.msra.mxu0 0
        %329 = vmatprep.subr.bf16.mxu0 0
        %330 = vmatpush1.bf16.xpose.msra.mxu0 0
        %331 = vmatprep.subr.bf16.mxu0 0
        %332 = vmatpush1.bf16.xpose.msra.mxu0 0
        %333 = vmatprep.subr.bf16.mxu0 0
        %334 = vmatpush1.bf16.xpose.msra.mxu0 0
        %335 = vmatprep.subr.bf16.mxu0 0
        %336 = vmatpush1.bf16.xpose.msra.mxu0 0
        %337 = vmatprep.subr.bf16.mxu0 0
        %338 = vmatpush1.bf16.xpose.msra.mxu0 0
        %339 = vmatprep.subr.bf16.mxu0 0
        %340 = vmatpush1.bf16.xpose.msra.mxu0 0
        %341 = vmatprep.subr.bf16.mxu0 0
        %342 = vmatpush1.bf16.xpose.msra.mxu0 %v325
        %343 = vmatprep.subr.bf16.mxu0 0
        %344 = vmatpush2.bf16.xpose.msra.mxu0 0
        %345 = vmatprep.subr.bf16.mxu0 0
        %346 = vmatpush2.bf16.xpose.msra.mxu0 0
        %347 = vmatprep.subr.bf16.mxu0 0
        %348 = vmatpush2.bf16.xpose.msra.mxu0 0
        %349 = vmatprep.subr.bf16.mxu0 0
        %350 = vmatpush2.bf16.xpose.msra.mxu0 0
        %351 = vmatprep.subr.bf16.mxu0 0
        %352 = vmatpush2.bf16.xpose.msra.mxu0 0
        %353 = vmatprep.subr.bf16.mxu0 0
        %354 = vmatpush2.bf16.xpose.msra.mxu0 0
        %355 = vmatprep.subr.bf16.mxu0 0
        %356 = vmatpush2.bf16.xpose.msra.mxu0 0
        %357 = vmatprep.subr.bf16.mxu0 0
        %358 = vmatpush2.bf16.xpose.msra.mxu0 0
        %359 = vmatprep.mubr.bf16.mxu0 0
        %360 = vmatmul.mubr.bf16.gmra.mxu0 %v322
        %v361 = vpop.f32.mrf.mxu0
        %v362 = vadd.f32 0.0, %v361
        %v363 = vpop.f32.mrf.mxu0
        %v364 = vpop.f32.mrf.mxu0
        %v365 = vpop.f32.mrf.mxu0
        %366 = vdwg.mxu0
        %vm367 = vcmask 64512
        %v368 = vsel %vm367, %v362, -inf
        %369 = vmax.xlane.f32.xlu0 %v368
        %v370 = vpop.xlane.xlu0 %369
        %v371 = vsub.f32 %v362, %v370
        %v372 = vmul.f32 %v371, 1.442695
        %v373 = vpow.pop %v372
        %v374 = vsel %vm367, %v373, 0.0
        %375 = vadd.xlane.f32.xlu0 %v374
        %v376 = vpop.xlane.xlu0 %375
        %v377 = vrcp.pop %v376
        %v378 = vmul.f32 %v373, %v377
        %v379 = vpack.c.bf16 %v378, %v378
        %v380 = vpack.c.bf16 %v317, %v317
        %v382 = vsel %vm367, %v379, 0
        %vm384 = vcmask 1043456
        %v386 = vsel %vm384, %v380, 0
        %388 = vmatprep.subr.bf16.mxu0 0
        %389 = vmatpush1.bf16.msra.mxu0 0
        %390 = vmatprep.subr.bf16.mxu0 0
        %391 = vmatpush1.bf16.msra.mxu0 0
        %392 = vmatprep.subr.bf16.mxu0 0
        %393 = vmatpush1.bf16.msra.mxu0 0
        %394 = vmatprep.subr.bf16.mxu0 0
        %395 = vmatpush1.bf16.msra.mxu0 0
        %396 = vmatprep.subr.bf16.mxu0 0
        %397 = vmatpush1.bf16.msra.mxu0 0
        %398 = vmatprep.subr.bf16.mxu0 0
        %399 = vmatpush1.bf16.msra.mxu0 0
        %400 = vmatprep.subr.bf16.mxu0 0
        %401 = vmatpush1.bf16.msra.mxu0 0
        %402 = vmatprep.subr.bf16.mxu0 0
        %403 = vmatpush1.bf16.msra.mxu0 %v386
        %404 = vmatprep.subr.bf16.mxu0 0
        %405 = vmatpush2.bf16.msra.mxu0 0
        %406 = vmatprep.subr.bf16.mxu0 0
        %407 = vmatpush2.bf16.msra.mxu0 0
        %408 = vmatprep.subr.bf16.mxu0 0
        %409 = vmatpush2.bf16.msra.mxu0 0
        %410 = vmatprep.subr.bf16.mxu0 0
        %411 = vmatpush2.bf16.msra.mxu0 0
        %412 = vmatprep.subr.bf16.mxu0 0
        %413 = vmatpush2.bf16.msra.mxu0 0
        %414 = vmatprep.subr.bf16.mxu0 0
        %415 = vmatpush2.bf16.msra.mxu0 0
        %416 = vmatprep.subr.bf16.mxu0 0
        %417 = vmatpush2.bf16.msra.mxu0 0
        %418 = vmatprep.subr.bf16.mxu0 0
        %419 = vmatpush2.bf16.msra.mxu0 0
        %420 = vmatprep.mubr.bf16.mxu0 0
        %421 = vmatmul.mubr.bf16.gmra.mxu0 %v382
        %v422 = vpop.f32.mrf.mxu0
        %v423 = vadd.f32 0.0, %v422
        %v424 = vpop.f32.mrf.mxu0
        %v425 = vpop.f32.mrf.mxu0
        %v426 = vpop.f32.mrf.mxu0
        %427 = vdwg.mxu0
        %428 = vst.msk [vmem:[%s306] sm:$0xff] %vm367, %v378
        %429 = vst.msk [vmem:[%s313] sm:$0xff] %vm320, %v423
        %s430 = sand.u32 %s130, 1
        %s431 = scalar_lea.sflag [#allocation4], %s430
        %s432 = sand.u32 %s130, 1
        %s433 = smul.addr %s432, 8
        %s434 = scalar_lea.vmem [#allocation8], %s433
        %s435 = sand.u32 %s158, 1
        %s436 = scalar_lea.sflag [#allocation10], %s435
        %s437 = sand.u32 %s158, 1
        %s438 = smul.addr %s437, 8
        %s439 = scalar_lea.vmem [#allocation9], %s438
        // Predicated region
        $region45: #{tpu_custom_call.1} parent=31 // pred_check
          %p440 = pneg %p140
        $region46: #{tpu_custom_call.1} parent=31 // pred_check_branch
          %442 = sbr.rel (%p440) target = $region48
        $region47: #{tpu_custom_call.1} parent=31 // pred_region
          %s444 = ssub.s32 128, 128
          %445 = vsyncadd %s431, %s444
          %s446 = sadd.s32 %s33, %s32
          %s447 = smul.addr %s446, 128
          %s448 = scalar_lea.hbm %s3, %s447
          %s450 = sshll.u32 %s434, 4
          %s451 = int_to_ptr.vmem [resolvable:$true] %s450
          %453 = dma.vmem_to_hbm [thread:$0]  %s451, 128, %s448, %s431
        $region48: #{tpu_custom_call.1} parent=31 // pred_fallthru
          _
        // Predicated region
        $region49: #{tpu_custom_call.1} parent=31 // pred_check
          %p454 = pneg %p168
        $region50: #{tpu_custom_call.1} parent=31 // pred_check_branch
          %456 = sbr.rel (%p454) target = $region52
        $region51: #{tpu_custom_call.1} parent=31 // pred_region
          %s458 = ssub.s32 128, 128
          %459 = vsyncadd %s436, %s458
          %s460 = sadd.s32 %s33, %s32
          %s461 = smul.addr %s460, 128
          %s462 = scalar_lea.hbm %s4, %s461
          %s464 = sshll.u32 %s439, 4
          %s465 = int_to_ptr.vmem [resolvable:$true] %s464
          %467 = dma.vmem_to_hbm [thread:$0]  %s465, 128, %s462, %s436
        $region52: #{tpu_custom_call.1} parent=31 // pred_fallthru
          _
      $region32: #{tpu_custom_call.1} parent=5 // pred_fallthru
        _
      %p468 = scmp.le.s32.totalorder 2, %s23
      // Predicated region
      $region53: #{tpu_custom_call.1} parent=5 // pred_check
        %p469 = pneg %p468
      $region54: #{tpu_custom_call.1} parent=5 // pred_check_branch
        %471 = sbr.rel (%p469) target = $region56
      $region55: #{tpu_custom_call.1} parent=5 // pred_region
        %s472 = ssub.s32 %s23, 2
        // Predicated region
        $region57: #{tpu_custom_call.1} parent=55 // pred_check
          %p473 = pneg %p146
        $region58: #{tpu_custom_call.1} parent=55 // pred_check_branch
          %475 = sbr.rel (%p473) target = $region60
        $region59: #{tpu_custom_call.1} parent=55 // pred_region
          %s476 = sand.u32 %s131, 1
          %s477 = scalar_lea.sflag [#allocation4], %s476
          %s478 = sand.u32 %s131, 1
          %s479 = smul.addr %s478, 8
          %s480 = scalar_lea.vmem [#allocation8], %s479
          %481 = dma.done %s477, 128
        $region60: #{tpu_custom_call.1} parent=55 // pred_fallthru
          _
        // Predicated region
        $region61: #{tpu_custom_call.1} parent=55 // pred_check
          %p482 = pneg %p174
        $region62: #{tpu_custom_call.1} parent=55 // pred_check_branch
          %484 = sbr.rel (%p482) target = $region64
        $region63: #{tpu_custom_call.1} parent=55 // pred_region
          %s485 = sand.u32 %s159, 1
          %s486 = scalar_lea.sflag [#allocation10], %s485
          %s487 = sand.u32 %s159, 1
          %s488 = smul.addr %s487, 8
          %s489 = scalar_lea.vmem [#allocation9], %s488
          %490 = dma.done %s486, 128
        $region64: #{tpu_custom_call.1} parent=55 // pred_fallthru
          _
      $region56: #{tpu_custom_call.1} parent=5 // pred_fallthru
        _
    $region6: #{tpu_custom_call.1} parent=1 // loop_footer
      %s27 = sadd.s32 1, %s23
    $region7: #{tpu_custom_call.1} parent=1 // loop_footer_branch
      %22 = sbr.rel target = $region3
    $region8: #{tpu_custom_call.1} parent=1 // loop_exit
      _
    %491 = vsyncpa [#allocation3], 1
    %s492 = scalar_lea.sflag [#allocation3], 1
    %493 = vsyncpa %s492, 1
    %494 = vsyncpa [#allocation6], 1
    %s495 = scalar_lea.sflag [#allocation6], 1
    %496 = vsyncpa %s495, 1
    %497 = vsyncpa [#allocation4], 1
    %s498 = scalar_lea.sflag [#allocation4], 1
    %499 = vsyncpa %s498, 1
    %500 = vsyncpa [#allocation10], 1
    %s501 = scalar_lea.sflag [#allocation10], 1
    %502 = vsyncpa %s501, 1

</llo_original>
